<compile_context>
chip_gen: v5e
topology: v5e:2x2
jax: 0.10.0
libtpu: 0.0.40
codegen_flags: <defaults>
</compile_context>

<pallas_src>
import functools

import jax
import jax.numpy as jnp
from jax import lax
from jax.experimental import pallas as pl
from jax.experimental.pallas import tpu as pltpu


def _round_up(x, m):
    return (x + m - 1) // m * m


def _vmem_cap_bytes():
    try:
        return int(pltpu.get_tpu_info().vmem_capacity_bytes)
    except Exception:
        return 64 * 1024 * 1024  # conservative: v7x per-TC physical VMEM


def _layernorm_rows(h, g_ref, beta_ref, eps):
    # Single-pass mean / E[x^2]; var clamped at 0.  eps=1e-12 matches the
    # PyTorch default; padded rows (near-zero variance) give large-but-finite
    # values that are sliced off before returning.
    mean = jnp.mean(h, axis=-1, keepdims=True)
    mean_sq = jnp.mean(h * h, axis=-1, keepdims=True)
    var = jnp.maximum(mean_sq - mean * mean, 0.0)
    inv = lax.rsqrt(var + eps)
    return (h - mean) * inv * g_ref[...].astype(jnp.float32) + beta_ref[...].astype(jnp.float32)


def _ernie_resident_kernel(x_ref, w_ref, b_ref, res_ref, g_ref, beta_ref, o_ref, *, eps):
    # x_ref:   (tm, K_pad) bf16      w_ref: (K_pad, N) bf16 (resident, constant block)
    # b_ref:   (1, N) f32            res_ref: (tm, N) native dtype
    # g_ref/beta_ref: (1, N) f32     o_ref: (tm, N)
    h = jnp.dot(x_ref[...], w_ref[...], preferred_element_type=jnp.float32)
    h = h + b_ref[...].astype(jnp.float32) + res_ref[...].astype(jnp.float32)
    o_ref[...] = _layernorm_rows(h, g_ref, beta_ref, eps).astype(o_ref.dtype)


def _ernie_ktiled_kernel(x_ref, w_ref, b_ref, res_ref, g_ref, beta_ref, o_ref, acc_ref, *, eps):
    # Fallback for very large K.  INVARIANT: K is the innermost grid axis; the
    # output block index is constant across K (revisited, written back once
    # per M tile).  Do not reorder the grid.
    k = pl.program_id(1)

    @pl.when(k == 0)
    def _():
        # Fold bias + residual into the accumulator init.
        acc_ref[...] = (b_ref[...].astype(jnp.float32)
                        + res_ref[...].astype(jnp.float32))

    acc_ref[...] += jnp.dot(x_ref[...], w_ref[...], preferred_element_type=jnp.float32)

    @pl.when(k == pl.num_programs(1) - 1)
    def _():
        o_ref[...] = _layernorm_rows(acc_ref[...], g_ref, beta_ref, eps).astype(o_ref.dtype)


def prepare_dense_params(weight, bias):
    """One-time parameter prep (hoisted out of the per-call path).

    nn.Linear weight is (hidden, intermediate); we store it transposed as
    (intermediate, hidden), cast to bf16 for the MXU, and zero-pad the
    reduction dim (K) to a multiple of 128 here, once (matmul-neutral).
    """
    w_t = jnp.asarray(weight).T.astype(jnp.bfloat16)          # (K, N)
    K, N = w_t.shape
    K_pad = _round_up(K, 128)
    if K_pad != K:
        w_t = jnp.pad(w_t, ((0, K_pad - K), (0, 0)))
    b2d = jnp.asarray(bias).reshape(1, -1).astype(jnp.float32)  # (1, N)
    return w_t, b2d


def ernie_layout_output(hidden_states, input_tensor, w_t, b2d, gamma, beta, *,
                        eps=1e-12, tm=512, tk=1024):
    """Fused dense + residual-add + LayerNorm (ErnieLayoutOutput.forward, eval).

    hidden_states: (..., intermediate)   input_tensor: (..., hidden)
    w_t: (K_pad, hidden) bf16, b2d: (1, hidden) f32 (from prepare_dense_params)
    gamma/beta: (hidden,)
    """
    # TODO(synk): nn.Dropout / DropPath in training mode (RNG masking) are not
    # implemented; both are identity at inference, which this kernel computes.
    orig_shape = input_tensor.shape
    K = hidden_states.shape[-1]
    K_pad, N = w_t.shape
    assert K_pad >= K and K_pad % 128 == 0, "use prepare_dense_params for w_t"

    x2d = hidden_states.reshape(-1, K).astype(jnp.bfloat16)
    res2d = input_tensor.reshape(-1, N)          # keep native dtype; upcast in-kernel
    M = x2d.shape[0]

    # ---- M tile selection: minimal padding waste, >=2 blocks on the parallel
    # axis when M allows (megacore), multiple of 16 (bf16 sublane packing).
    n_tiles = max(pl.cdiv(M, tm), 1)
    if n_tiles < 2 and M >= 32:
        n_tiles = 2
    tm_eff = min(_round_up(pl.cdiv(M, n_tiles), 16), _round_up(M, 16))
    M_pad = n_tiles * tm_eff

    if M_pad != M or K_pad != K:
        x2d = jnp.pad(x2d, ((0, M_pad - M), (0, K_pad - K)))
    if M_pad != M:
        res2d = jnp.pad(res2d, ((0, M_pad - M), (0, 0)))

    g2d = jnp.asarray(gamma).reshape(1, N).astype(jnp.float32)
    be2d = jnp.asarray(beta).reshape(1, N).astype(jnp.float32)

    res_isz = res2d.dtype.itemsize
    out_dtype = input_tensor.dtype
    out_isz = jnp.dtype(out_dtype).itemsize

    vmem_cap = _vmem_cap_bytes()
    budget = int(0.70 * vmem_cap)     # stay well below physical VMEM (v7x: 64 MiB/TC)

    w_bytes = K_pad * N * 2
    # Resident-W working set (streamed operands double-buffered; W allocated
    # x2 but only DMA'd once since its block index never changes).
    est_res = (2 * w_bytes
               + 2 * tm_eff * K_pad * 2       # x tile, bf16
               + 2 * tm_eff * N * res_isz     # residual tile (native dtype)
               + 2 * tm_eff * N * out_isz     # output tile
               + tm_eff * N * 4               # f32 epilogue intermediate
               + 8 * N * 4)                   # bias / gamma / beta
    use_resident = int(1.25 * est_res) <= budget

    cost = pl.CostEstimate(
        flops=2 * M_pad * N * K_pad,
        transcendentals=M_pad,                # one rsqrt per row
        bytes_accessed=(x2d.size * 2 + w_t.size * 2 + res2d.size * res_isz
                        + M_pad * N * out_isz + 3 * N * 4),
    )

    if use_resident:
        vmem_limit = int(min(max(int(1.25 * est_res), 8 << 20), budget))
        out = pl.pallas_call(
            functools.partial(_ernie_resident_kernel, eps=float(eps)),
            out_shape=jax.ShapeDtypeStruct((M_pad, N), out_dtype),
            grid_spec=pltpu.PrefetchScalarGridSpec(
                num_scalar_prefetch=0,
                grid=(M_pad // tm_eff,),
                in_specs=[
                    pl.BlockSpec((tm_eff, K_pad), lambda i: (i, 0)),  # x tile
                    pl.BlockSpec((K_pad, N), lambda i: (0, 0)),       # W^T (resident)
                    pl.BlockSpec((1, N), lambda i: (0, 0)),           # bias
                    pl.BlockSpec((tm_eff, N), lambda i: (i, 0)),      # residual
                    pl.BlockSpec((1, N), lambda i: (0, 0)),           # gamma
                    pl.BlockSpec((1, N), lambda i: (0, 0)),           # beta
                ],
                out_specs=pl.BlockSpec((tm_eff, N), lambda i: (i, 0)),
            ),
            compiler_params=pltpu.CompilerParams(
                dimension_semantics=("parallel",),
                vmem_limit_bytes=vmem_limit,
            ),
            cost_estimate=cost,
        )(x2d, w_t, b2d, res2d, g2d, be2d)
    else:
        # Very large K: keep the K reduction in the grid (innermost axis).
        tk_eff = 128
        for cand in (tk, 2048, 1024, 512, 256, 128):
            if cand <= K_pad and K_pad % cand == 0 and cand % 128 == 0:
                tk_eff = cand
                break
        est_kt = (2 * tm_eff * tk_eff * 2
                  + 2 * tk_eff * N * 2
                  + 2 * tm_eff * N * res_isz
                  + 2 * tm_eff * N * out_isz
                  + tm_eff * N * 4            # accumulator scratch
                  + 8 * N * 4)
        vmem_limit = int(min(max(int(1.25 * est_kt), 8 << 20), budget))
        out = pl.pallas_call(
            functools.partial(_ernie_ktiled_kernel, eps=float(eps)),
            out_shape=jax.ShapeDtypeStruct((M_pad, N), out_dtype),
            grid_spec=pltpu.PrefetchScalarGridSpec(
                num_scalar_prefetch=0,
                grid=(M_pad // tm_eff, K_pad // tk_eff),
                in_specs=[
                    pl.BlockSpec((tm_eff, tk_eff), lambda i, k: (i, k)),  # x
                    pl.BlockSpec((tk_eff, N), lambda i, k: (k, 0)),       # W^T
                    pl.BlockSpec((1, N), lambda i, k: (0, 0)),            # bias
                    pl.BlockSpec((tm_eff, N), lambda i, k: (i, 0)),       # residual
                    pl.BlockSpec((1, N), lambda i, k: (0, 0)),            # gamma
                    pl.BlockSpec((1, N), lambda i, k: (0, 0)),            # beta
                ],
                out_specs=pl.BlockSpec((tm_eff, N), lambda i, k: (i, 0)),
                scratch_shapes=[pltpu.VMEM((tm_eff, N), jnp.float32)],
            ),
            compiler_params=pltpu.CompilerParams(
                dimension_semantics=("parallel", "arbitrary"),
                vmem_limit_bytes=vmem_limit,
            ),
            cost_estimate=cost,
        )(x2d, w_t, b2d, res2d, g2d, be2d)

    if M_pad != M:
        out = out[:M]
    return out.reshape(orig_shape)


if __name__ == "__main__":
    # Small config consistent with the module: hidden_size=32, intermediate_size=128
    batch, seq, hidden, intermediate = 2, 8, 32, 128
    eps = 1e-12

    key = jax.random.PRNGKey(0)
    kx, kr, kw, kb, kg, kbe = jax.random.split(key, 6)

    hidden_states = jax.random.normal(kx, (batch, seq, intermediate), dtype=jnp.float32)
    input_tensor = jax.random.normal(kr, (batch, seq, hidden), dtype=jnp.float32)

    # nn.Linear(intermediate_size, hidden_size): W (hidden, intermediate), b (hidden,)
    weight = jax.random.normal(kw, (hidden, intermediate), dtype=jnp.float32) * 0.02
    bias = jax.random.normal(kb, (hidden,), dtype=jnp.float32) * 0.02
    gamma = jnp.ones((hidden,), jnp.float32) + 0.1 * jax.random.normal(kg, (hidden,), dtype=jnp.float32)
    beta = 0.1 * jax.random.normal(kbe, (hidden,), dtype=jnp.float32)

    # One-time parameter prep (transpose + bf16 cast + K padding hoisted out).
    w_t, b2d = prepare_dense_params(weight, bias)

    y = ernie_layout_output(hidden_states, input_tensor, w_t, b2d, gamma, beta, eps=eps)
    y = jax.block_until_ready(y)
    assert y.shape == (batch, seq, hidden)

    # Reference 1: full f32 (PyTorch eval semantics) -- loose tolerance (bf16 MXU inputs).
    h = hidden_states @ weight.T + bias + input_tensor
    mu = h.mean(-1, keepdims=True)
    var = ((h - mu) ** 2).mean(-1, keepdims=True)
    ref_f32 = (h - mu) / jnp.sqrt(var + eps) * gamma + beta

    # Reference 2: same bf16-quantized inputs as the kernel -- tight tolerance.
    hb = hidden_states.astype(jnp.bfloat16).astype(jnp.float32)
    wb = weight.astype(jnp.bfloat16).astype(jnp.float32)
    h2 = hb @ wb.T + bias + input_tensor
    mu2 = h2.mean(-1, keepdims=True)
    var2 = ((h2 - mu2) ** 2).mean(-1, keepdims=True)
    ref_bf16 = (h2 - mu2) / jnp.sqrt(var2 + eps) * gamma + beta

    assert jnp.allclose(y, ref_bf16, atol=2e-3, rtol=2e-3), float(jnp.max(jnp.abs(y - ref_bf16)))
    assert jnp.allclose(y, ref_f32, atol=5e-2, rtol=5e-2), float(jnp.max(jnp.abs(y - ref_f32)))

    print("KERNEL_OK")
</pallas_src>

<mosaic_0001>
module attributes {stable_mosaic.version = 11 : i64} {
  func.func @_ernie_resident_kernel(%arg0: i32, %arg1: memref<16x128xbf16, #tpu.memory_space<vmem>>, %arg2: memref<128x32xbf16, #tpu.memory_space<vmem>>, %arg3: memref<1x32xf32, #tpu.memory_space<vmem>>, %arg4: memref<16x32xf32, #tpu.memory_space<vmem>>, %arg5: memref<1x32xf32, #tpu.memory_space<vmem>>, %arg6: memref<1x32xf32, #tpu.memory_space<vmem>>, %arg7: memref<16x32xf32, #tpu.memory_space<vmem>>) attributes {dimension_semantics = [#tpu.dimension_semantics<parallel>], iteration_bounds = array<i64: 1>, scalar_prefetch = 0 : i64, scratch_operands = 0 : i64, tpu.core_type = #tpu.core_type<tc>, window_params = [{transform_indices = @transform_0, window_bounds = array<i64: 16, 128>}, {pipeline_mode = #tpu.pipeline_mode<synchronous>, transform_indices = @transform_1, window_bounds = array<i64: 128, 32>}, {pipeline_mode = #tpu.pipeline_mode<synchronous>, transform_indices = @transform_2, window_bounds = array<i64: 1, 32>}, {transform_indices = @transform_3, window_bounds = array<i64: 16, 32>}, {pipeline_mode = #tpu.pipeline_mode<synchronous>, transform_indices = @transform_4, window_bounds = array<i64: 1, 32>}, {pipeline_mode = #tpu.pipeline_mode<synchronous>, transform_indices = @transform_5, window_bounds = array<i64: 1, 32>}, {transform_indices = @transform_6, window_bounds = array<i64: 16, 32>}]} {
    %c0 = arith.constant 0 : index
    %c0_0 = arith.constant 0 : index
    %0 = vector.load %arg1[%c0, %c0_0] : memref<16x128xbf16, #tpu.memory_space<vmem>>, vector<16x128xbf16>
    %c0_1 = arith.constant 0 : index
    %c0_2 = arith.constant 0 : index
    %1 = vector.load %arg2[%c0_1, %c0_2] : memref<128x32xbf16, #tpu.memory_space<vmem>>, vector<128x32xbf16>
    %cst = arith.constant dense<0.000000e+00> : vector<16x32xf32>
    %2 = tpu.matmul %0, %1, %cst {dimension_numbers = #tpu.dot_dimension_numbers<[1], [0], [0], [1], [0, 0, 1, 1], [], []>} : vector<16x128xbf16>, vector<128x32xbf16>, vector<16x32xf32> -> vector<16x32xf32>
    %c0_3 = arith.constant 0 : index
    %c0_4 = arith.constant 0 : index
    %3 = vector.load %arg3[%c0_3, %c0_4] : memref<1x32xf32, #tpu.memory_space<vmem>>, vector<1x32xf32>
    %4 = vector.broadcast %3 : vector<1x32xf32> to vector<16x32xf32>
    %5 = arith.addf %2, %4 : vector<16x32xf32>
    %c0_5 = arith.constant 0 : index
    %c0_6 = arith.constant 0 : index
    %6 = vector.load %arg4[%c0_5, %c0_6] : memref<16x32xf32, #tpu.memory_space<vmem>>, vector<16x32xf32>
    %7 = arith.addf %5, %6 : vector<16x32xf32>
    %cst_7 = arith.constant dense<0.000000e+00> : vector<16xf32>
    %8 = vector.multi_reduction <add>, %7, %cst_7 [1] : vector<16x32xf32> to vector<16xf32>
    %9 = vector.shape_cast %8 : vector<16xf32> to vector<16x1xf32>
    %cst_8 = arith.constant 3.200000e+01 : f32
    %10 = vector.broadcast %cst_8 : f32 to vector<16x1xf32>
    %11 = arith.divf %9, %10 : vector<16x1xf32>
    %12 = arith.mulf %7, %7 : vector<16x32xf32>
    %cst_9 = arith.constant dense<0.000000e+00> : vector<16xf32>
    %13 = vector.multi_reduction <add>, %12, %cst_9 [1] : vector<16x32xf32> to vector<16xf32>
    %14 = vector.shape_cast %13 : vector<16xf32> to vector<16x1xf32>
    %cst_10 = arith.constant 3.200000e+01 : f32
    %15 = vector.broadcast %cst_10 : f32 to vector<16x1xf32>
    %16 = arith.divf %14, %15 : vector<16x1xf32>
    %17 = arith.mulf %11, %11 : vector<16x1xf32>
    %18 = arith.subf %16, %17 : vector<16x1xf32>
    %cst_11 = arith.constant 0.000000e+00 : f32
    %19 = vector.broadcast %cst_11 : f32 to vector<16x1xf32>
    %20 = arith.maximumf %18, %19 : vector<16x1xf32>
    %cst_12 = arith.constant 9.99999996E-13 : f32
    %21 = vector.broadcast %cst_12 : f32 to vector<16x1xf32>
    %22 = arith.addf %20, %21 : vector<16x1xf32>
    %23 = math.rsqrt %22 : vector<16x1xf32>
    %24 = vector.broadcast %11 : vector<16x1xf32> to vector<16x32xf32>
    %25 = arith.subf %7, %24 : vector<16x32xf32>
    %26 = vector.broadcast %23 : vector<16x1xf32> to vector<16x32xf32>
    %27 = arith.mulf %25, %26 : vector<16x32xf32>
    %c0_13 = arith.constant 0 : index
    %c0_14 = arith.constant 0 : index
    %28 = vector.load %arg5[%c0_13, %c0_14] : memref<1x32xf32, #tpu.memory_space<vmem>>, vector<1x32xf32>
    %29 = vector.broadcast %28 : vector<1x32xf32> to vector<16x32xf32>
    %30 = arith.mulf %27, %29 : vector<16x32xf32>
    %c0_15 = arith.constant 0 : index
    %c0_16 = arith.constant 0 : index
    %31 = vector.load %arg6[%c0_15, %c0_16] : memref<1x32xf32, #tpu.memory_space<vmem>>, vector<1x32xf32>
    %32 = vector.broadcast %31 : vector<1x32xf32> to vector<16x32xf32>
    %33 = arith.addf %30, %32 : vector<16x32xf32>
    %c0_17 = arith.constant 0 : index
    %c0_18 = arith.constant 0 : index
    %34 = vector.load %arg7[%c0_17, %c0_18] : memref<16x32xf32, #tpu.memory_space<vmem>>, vector<16x32xf32>
    tpu.vector_store %arg7[%c0_17, %c0_18], %33 {strides = array<i32>} : memref<16x32xf32, #tpu.memory_space<vmem>>, vector<16x32xf32>,
    return
  }
  func.func @transform_0(%arg0: i32) -> (i32, i32) {
    %c0_i32 = arith.constant 0 : i32
    %c0_i32_0 = arith.constant 0 : i32
    return %arg0, %c0_i32 : i32, i32
  }
  func.func @transform_1(%arg0: i32) -> (i32, i32) {
    %c0_i32 = arith.constant 0 : i32
    %c0_i32_0 = arith.constant 0 : i32
    %c0_i32_1 = arith.constant 0 : i32
    return %c0_i32, %c0_i32_0 : i32, i32
  }
  func.func @transform_2(%arg0: i32) -> (i32, i32) {
    %c0_i32 = arith.constant 0 : i32
    %c0_i32_0 = arith.constant 0 : i32
    %c0_i32_1 = arith.constant 0 : i32
    return %c0_i32, %c0_i32_0 : i32, i32
  }
  func.func @transform_3(%arg0: i32) -> (i32, i32) {
    %c0_i32 = arith.constant 0 : i32
    %c0_i32_0 = arith.constant 0 : i32
    return %arg0, %c0_i32 : i32, i32
  }
  func.func @transform_4(%arg0: i32) -> (i32, i32) {
    %c0_i32 = arith.constant 0 : i32
    %c0_i32_0 = arith.constant 0 : i32
    %c0_i32_1 = arith.constant 0 : i32
    return %c0_i32, %c0_i32_0 : i32, i32
  }
  func.func @transform_5(%arg0: i32) -> (i32, i32) {
    %c0_i32 = arith.constant 0 : i32
    %c0_i32_0 = arith.constant 0 : i32
    %c0_i32_1 = arith.constant 0 : i32
    return %c0_i32, %c0_i32_0 : i32, i32
  }
  func.func @transform_6(%arg0: i32) -> (i32, i32) {
    %c0_i32 = arith.constant 0 : i32
    %c0_i32_0 = arith.constant 0 : i32
    return %arg0, %c0_i32 : i32, i32
  }
}

</mosaic_0001>

<llo_original>
// kernel: tpu_custom_call.1
$region0: #{tpu_custom_call.1}
  #allocation0 [shape = 'u32[]', space=smem, size = 0x4, offset = 0x4, fixed_abs, tag = 'smem constant byte address 0x4 - core index']
  #allocation1 [shape = 'u32[72,128]{1,0:T(1,128)}', space=vmem, size = 0x9000, scoped, tag = 'internal scratch']
  %s0 = inlined_call_operand.vmem [shape: bf16[16,128], index: 0, kind: input, shape index: {}]
  %s1 = inlined_call_operand.vmem [shape: bf16[128,32], index: 1, kind: input, shape index: {}]
  %s2 = inlined_call_operand.vmem [shape: f32[1,32], index: 2, kind: input, shape index: {}]
  %s3 = inlined_call_operand.vmem [shape: f32[16,32], index: 3, kind: input, shape index: {}]
  %s4 = inlined_call_operand.vmem [shape: f32[1,32], index: 4, kind: input, shape index: {}]
  %s5 = inlined_call_operand.vmem [shape: f32[1,32], index: 5, kind: input, shape index: {}]
  %s6 = inlined_call_operand.hbm [shape: f32[16,32], index: 6, kind: output, shape index: {}]
  %s7 = sld [smem:[#allocation0]]
  $region34: #{tpu_custom_call.1} parent=0
    _
  %s9 = ssub.s32 1, %s7
  %s10 = scalar_select 0, %s9, %s7
  $region1: #{tpu_custom_call.1} parent=0
    #allocation2 [shape = 'u8[8192]{0}', space=vmem, size = 0x2000, scoped, tag = 'output window, operand 0, single buffered']
    #allocation3 [shape = 's32[1]{0}', space=sflag, size = 0x4, scoped, tag = 'scoped memory for tpu_custom_call.1']
    %11 = vsyncpa [#allocation3], 0
    // Predicated region
    $region2: #{tpu_custom_call.1} parent=1 // pred_check
      _
    $region3: #{tpu_custom_call.1} parent=1 // pred_check_branch
      %13 = sbr.rel (0) target = $region5
    $region4: #{tpu_custom_call.1} parent=1 // pred_region
      _
    $region5: #{tpu_custom_call.1} parent=1 // pred_fallthru
      _
    // Predicated region
    $region6: #{tpu_custom_call.1} parent=1 // pred_check
      _
    $region7: #{tpu_custom_call.1} parent=1 // pred_check_branch
      %15 = sbr.rel (0) target = $region9
    $region8: #{tpu_custom_call.1} parent=1 // pred_region
      _
    $region9: #{tpu_custom_call.1} parent=1 // pred_fallthru
      _
    // Predicated region
    $region10: #{tpu_custom_call.1} parent=1 // pred_check
      _
    $region11: #{tpu_custom_call.1} parent=1 // pred_check_branch
      %17 = sbr.rel (0) target = $region13
    $region12: #{tpu_custom_call.1} parent=1 // pred_region
      _
    $region13: #{tpu_custom_call.1} parent=1 // pred_fallthru
      _
    // Predicated region
    $region14: #{tpu_custom_call.1} parent=1 // pred_check
      _
    $region15: #{tpu_custom_call.1} parent=1 // pred_check_branch
      %19 = sbr.rel (0) target = $region17
    $region16: #{tpu_custom_call.1} parent=1 // pred_region
      _
    $region17: #{tpu_custom_call.1} parent=1 // pred_fallthru
      _
    // Predicated region
    $region18: #{tpu_custom_call.1} parent=1 // pred_check
      _
    $region19: #{tpu_custom_call.1} parent=1 // pred_check_branch
      %21 = sbr.rel (0) target = $region21
    $region20: #{tpu_custom_call.1} parent=1 // pred_region
      _
    $region21: #{tpu_custom_call.1} parent=1 // pred_fallthru
      _
    // Predicated region
    $region22: #{tpu_custom_call.1} parent=1 // pred_check
      _
    $region23: #{tpu_custom_call.1} parent=1 // pred_check_branch
      %23 = sbr.rel (0) target = $region25
    $region24: #{tpu_custom_call.1} parent=1 // pred_region
      _
    $region25: #{tpu_custom_call.1} parent=1 // pred_fallthru
      _
    %v24 = vld [vmem:[%s0] sm:$0xf]
    %v25 = vld [vmem:[%s0 + $0x4] sm:$0xf]
    %v26 = vld [vmem:[%s1] sm:$0xf]
    %v27 = vld [vmem:[%s1 + $0x4] sm:$0xf]
    %v28 = vld [vmem:[%s1 + $0x8] sm:$0xf]
    %v29 = vld [vmem:[%s1 + $0xc] sm:$0xf]
    %v30 = vld [vmem:[%s1 + $0x10] sm:$0xf]
    %v31 = vld [vmem:[%s1 + $0x14] sm:$0xf]
    %v32 = vld [vmem:[%s1 + $0x18] sm:$0xf]
    %v33 = vld [vmem:[%s1 + $0x1c] sm:$0xf]
    %v34 = vld [vmem:[%s1 + $0x20] sm:$0xf]
    %v35 = vld [vmem:[%s1 + $0x24] sm:$0xf]
    %v36 = vld [vmem:[%s1 + $0x28] sm:$0xf]
    %v37 = vld [vmem:[%s1 + $0x2c] sm:$0xf]
    %v38 = vld [vmem:[%s1 + $0x30] sm:$0xf]
    %v39 = vld [vmem:[%s1 + $0x34] sm:$0xf]
    %v40 = vld [vmem:[%s1 + $0x38] sm:$0xf]
    %v41 = vld [vmem:[%s1 + $0x3c] sm:$0xf]
    %v42 = vld [vmem:[%s2] sm:$0x1]
    %v44 = vperm.slane %v42, 0
    %v48 = vunpack.c.l.b16 %v24
    %v49 = vunpack.c.l.b16 %v25
    %v50 = vpack.c.b16 %v49, %v48
    %v68 = vunpack.c.l.b16 %v26
    %v69 = vunpack.c.l.b16 %v27
    %v70 = vunpack.c.l.b16 %v28
    %v71 = vunpack.c.l.b16 %v29
    %v72 = vunpack.c.l.b16 %v30
    %v73 = vunpack.c.l.b16 %v31
    %v74 = vunpack.c.l.b16 %v32
    %v75 = vunpack.c.l.b16 %v33
    %v76 = vunpack.c.l.b16 %v34
    %v77 = vunpack.c.l.b16 %v35
    %v78 = vunpack.c.l.b16 %v36
    %v79 = vunpack.c.l.b16 %v37
    %v80 = vunpack.c.l.b16 %v38
    %v81 = vunpack.c.l.b16 %v39
    %v82 = vunpack.c.l.b16 %v40
    %v83 = vunpack.c.l.b16 %v41
    %v84 = vpack.c.b16 %v69, %v68
    %v85 = vpack.c.b16 %v71, %v70
    %v86 = vpack.c.b16 %v73, %v72
    %v87 = vpack.c.b16 %v75, %v74
    %v88 = vpack.c.b16 %v77, %v76
    %v89 = vpack.c.b16 %v79, %v78
    %v90 = vpack.c.b16 %v81, %v80
    %v91 = vpack.c.b16 %v83, %v82
    %100 = vmatpush.bf16.msra.mxu0 %v91
    %101 = vmatpush.bf16.msra.mxu0 %v90
    %102 = vmatpush.bf16.msra.mxu0 %v89
    %103 = vmatpush.bf16.msra.mxu0 %v88
    %104 = vmatpush.bf16.msra.mxu0 %v87
    %105 = vmatpush.bf16.msra.mxu0 %v86
    %106 = vmatpush.bf16.msra.mxu0 %v85
    %107 = vmatpush.bf16.msra.mxu0 %v84
    %108 = vmatmul.bf16.gmra.mxu0 %v50
    %v109 = vpop.f32.mrf.mxu0
    %v110 = vadd.f32 %v44, %v109
    %v111 = vpop.f32.mrf.mxu0
    %v112 = vadd.f32 %v44, %v111
    %113 = vdwg.mxu0
    %v114 = vld [vmem:[%s3] sm:$0xff]
    %v115 = vld [vmem:[%s3 + $0x8] sm:$0xff]
    %v116 = vadd.f32 %v110, %v114
    %v117 = vadd.f32 %v112, %v115
    %vm118 = vcmask 261120
    %v119 = vsel %vm118, %v116, 0.0
    %120 = vadd.xlane.f32.xlu0 %v119
    %v121 = vpop.xlane.xlu0 %120
    %v122 = vsel %vm118, %v117, 0.0
    %123 = vadd.xlane.f32.xlu0 %v122
    %v124 = vpop.xlane.xlu0 %123
    %v125 = vrcp.pop 32.0
    %v126 = vmul.f32 32.0, %v125
    %v127 = vsub.f32 1.0, %v126
    %v128 = vmul.f32 %v125, %v127
    %v129 = vadd.f32 %v125, %v128
    %vm130 = vweird.f32 %v125
    %v131 = vsel %vm130, %v125, %v129
    %v132 = vmul.f32 %v121, %v131
    %v133 = vmul.f32 %v124, %v131
    %v134 = vmul.f32 %v116, %v116
    %v135 = vmul.f32 %v117, %v117
    %v136 = vsel %vm118, %v134, 0.0
    %137 = vadd.xlane.f32.xlu0 %v136
    %v138 = vpop.xlane.xlu0 %137
    %v139 = vsel %vm118, %v135, 0.0
    %140 = vadd.xlane.f32.xlu0 %v139
    %v141 = vpop.xlane.xlu0 %140
    %v142 = vmul.f32 %v138, %v131
    %v143 = vmul.f32 %v141, %v131
    %v144 = vmul.f32 %v132, %v132
    %v145 = vmul.f32 %v133, %v133
    %v146 = vsub.f32 %v142, %v144
    %v147 = vsub.f32 %v143, %v145
    %v148 = vmax.f32 %v146, 0.0
    %v149 = vmax.f32 %v147, 0.0
    %v150 = vadd.f32 %v148, 1e-12
    %v151 = vadd.f32 %v149, 1e-12
    %v152 = vrsqrt.pop %v150
    %v153 = vmul.f32 %v152, %v150
    %v154 = vmul.f32 %v153, %v152
    %v155 = vmul.f32 0.5, %v154
    %v156 = vsub.f32 1.5, %v155
    %v157 = vmul.f32 %v152, %v156
    %vm158 = vweird.f32 %v150
    %vm159 = vweird.f32 %v152
    %vm160 = vmor %vm158, %vm159
    %v161 = vsel %vm160, %v152, %v157
    %v162 = vrsqrt.pop %v151
    %v163 = vmul.f32 %v162, %v151
    %v164 = vmul.f32 %v163, %v162
    %v165 = vmul.f32 0.5, %v164
    %v166 = vsub.f32 1.5, %v165
    %v167 = vmul.f32 %v162, %v166
    %vm168 = vweird.f32 %v151
    %vm169 = vweird.f32 %v162
    %vm170 = vmor %vm168, %vm169
    %v171 = vsel %vm170, %v162, %v167
    %v172 = vsub.f32 %v116, %v132
    %v173 = vsub.f32 %v117, %v133
    %v174 = vmul.f32 %v172, %v161
    %v175 = vmul.f32 %v173, %v171
    %v176 = vld [vmem:[%s4] sm:$0x1]
    %v178 = vperm.slane %v176, 0
    %v180 = vmul.f32 %v174, %v178
    %v181 = vmul.f32 %v175, %v178
    %v182 = vld [vmem:[%s5] sm:$0x1]
    %v184 = vperm.slane %v182, 0
    %v186 = vadd.f32 %v180, %v184
    %v187 = vadd.f32 %v181, %v184
    %188 = vst.msk [vmem:[#allocation2] sm:$0xff] %vm118, %v186
    %189 = vst.msk [vmem:[#allocation2 + $0x8] sm:$0xff] %vm118, %v187
    // Predicated region
    $region26: #{tpu_custom_call.1} parent=1 // pred_check
      _
    $region27: #{tpu_custom_call.1} parent=1 // pred_check_branch
      %191 = sbr.rel (0) target = $region29
    $region28: #{tpu_custom_call.1} parent=1 // pred_region
      %193 = vsyncadd [#allocation3], 0
      %s194 = sshll.u32 [#allocation2], 4
      %s195 = int_to_ptr.vmem [resolvable:$true] %s194
      %s196 = sshll.u32 %s6, 4
      %s197 = int_to_ptr.hbm [resolvable:$true] %s196
      %202 = dma.vmem_to_hbm [thread:$0]  %s195, 256, %s197, [#allocation3], 128, 128, 8
    $region29: #{tpu_custom_call.1} parent=1 // pred_fallthru
      _
    // Predicated region
    $region30: #{tpu_custom_call.1} parent=1 // pred_check
      _
    $region31: #{tpu_custom_call.1} parent=1 // pred_check_branch
      %204 = sbr.rel (0) target = $region33
    $region32: #{tpu_custom_call.1} parent=1 // pred_region
      %206 = dma.done [#allocation3], 256
    $region33: #{tpu_custom_call.1} parent=1 // pred_fallthru
      _
    %207 = vsyncpa [#allocation3], 1

</llo_original>
